<compile_context>
chip_gen: v7x
topology: tpu7x:2x2x1
jax: 0.10.0
libtpu: 0.0.40
codegen_flags: <defaults>
</compile_context>

<pallas_src>
import functools

import jax
import jax.numpy as jnp
from jax.experimental import pallas as pl
from jax.experimental.pallas import tpu as pltpu


_EPS = 1e-12   # F.normalize eps


# --------------------------------------------------------------------------
# helpers
# --------------------------------------------------------------------------
def _round_up(x, m):
    return (x + m - 1) // m * m


def _vmem_limit_bytes():
    """Generation-aware scoped-VMEM limit: ~3/4 of physical VMEM, capped at
    96 MiB (v5e/v6e: 128 MiB phys -> 96 MiB; v7x: 64 MiB phys -> 48 MiB)."""
    cap = 64 << 20
    try:
        cap = int(getattr(pltpu.get_tpu_info(), "vmem_capacity_bytes", cap))
    except Exception:
        pass
    return int(max(32 << 20, min((cap * 3) // 4, 96 << 20)))


def _resident_spec(shape):
    """BlockSpec for an operand that is fully VMEM-resident across the grid
    (constant index_map).  Single-buffered: the second pipeline buffer of a
    revisited operand is never used and only burns VMEM."""
    index_map = lambda i: (0,) * len(shape)
    try:
        return pl.BlockSpec(shape, index_map, pipeline_mode=pl.Buffered(1))
    except TypeError:   # older jax without pipeline_mode on BlockSpec
        return pl.BlockSpec(shape, index_map)


def _pick_batch_tile(B, act_row_bytes, resident_bytes, vmem_limit):
    """Rows per grid step.

    - whole batch for tiny B (< 16): a single step is cheapest
    - otherwise guarantee >= 2 grid steps (both v7x TensorCores get work)
    - sized so double-buffered activations + resident weights fit the
      generation-aware VMEM budget; cap 1024 rows (512 on small-VMEM parts)
    """
    if B < 16:
        return B
    headroom = 2 << 20
    budget = vmem_limit - resident_bytes - headroom
    tb_vmem = max(8, budget // max(2 * act_row_bytes, 1))   # in+out double-buffered
    tb_split = _round_up(pl.cdiv(B, 2), 8)                  # >= 2 grid steps
    cap = 1024 if vmem_limit >= (48 << 20) else 512
    tb = min(tb_vmem, tb_split, cap, _round_up(B, 8))
    return int(max(8, (tb // 8) * 8))


# --------------------------------------------------------------------------
# fused kernel: N independent (normalize + linear) projections sharing batch
# --------------------------------------------------------------------------
def _normalize_project_pallas(xs, wts, b2s):
    """Fused row-wise L2-normalize + linear for several projections.

    xs[j]  : (B, Din_j)        activations (all share the batch dim B)
    wts[j] : (Din_j, Dout_j)   pre-transposed weights (activation dtype)
    b2s[j] : (1, Dout_j)       biases (f32)
    returns tuple of (B, Dout_j) arrays in the activation dtype.
    """
    n = len(xs)
    B = xs[0].shape[0]
    for x in xs:
        assert x.shape[0] == B

    def kernel(*refs):
        x_refs = refs[0:n]
        w_refs = refs[n:2 * n]
        b_refs = refs[2 * n:3 * n]
        o_refs = refs[3 * n:4 * n]
        for j in range(n):
            x = x_refs[j][...]                                 # native dtype -> MXU
            # f32-accumulated sum of squares without a full f32 copy of the tile.
            sq = jnp.sum(x * x, axis=-1, keepdims=True, dtype=jnp.float32)
            # F.normalize: x / max(||x||, eps); scale applied post-matmul.
            inv = 1.0 / jnp.maximum(jnp.sqrt(sq), _EPS)
            y = jnp.dot(x, w_refs[j][...], preferred_element_type=jnp.float32)
            y = y * inv + b_refs[j][...].astype(jnp.float32)
            o_refs[j][...] = y.astype(o_refs[j].dtype)

    vmem_limit = _vmem_limit_bytes()
    act_row_bytes = sum(
        (x.shape[1] * jnp.dtype(x.dtype).itemsize)
        + (w.shape[1] * jnp.dtype(x.dtype).itemsize)
        for x, w in zip(xs, wts))
    resident_bytes = sum(
        w.size * jnp.dtype(w.dtype).itemsize + b.size * jnp.dtype(b.dtype).itemsize
        for w, b in zip(wts, b2s))
    # TODO(synk): if a weight ever exceeds the VMEM budget, add a Din (K) grid
    # axis with an f32 accumulator instead of shrinking the batch tile to 8.
    tb = _pick_batch_tile(B, act_row_bytes, resident_bytes, vmem_limit)
    grid = (pl.cdiv(B, tb),)

    in_specs = (
        [pl.BlockSpec((tb, x.shape[1]), lambda i: (i, 0)) for x in xs]
        + [_resident_spec(w.shape) for w in wts]
        + [_resident_spec(b.shape) for b in b2s]
    )
    out_specs = [pl.BlockSpec((tb, w.shape[1]), lambda i: (i, 0)) for w in wts]
    out_shapes = tuple(
        jax.ShapeDtypeStruct((B, w.shape[1]), x.dtype) for x, w in zip(xs, wts))

    outs = pl.pallas_call(
        kernel,
        out_shape=out_shapes,
        grid=grid,
        in_specs=in_specs,
        out_specs=out_specs,
        compiler_params=pltpu.CompilerParams(
            dimension_semantics=("parallel",),     # split batch across TCs (v7x)
            vmem_limit_bytes=vmem_limit,
        ),
    )(*xs, *wts, *b2s)
    return outs


# --------------------------------------------------------------------------
# jitted forwards
# --------------------------------------------------------------------------
@jax.jit
def _cstp_forward_fused(protein, text, p_wt, p_b2, t_wt, t_b2):
    # weights in activation dtype -> true bf16 MXU path when inputs are bf16
    p, t = _normalize_project_pallas(
        (protein, text),
        (p_wt.astype(protein.dtype), t_wt.astype(text.dtype)),
        (p_b2, t_b2))
    return p, t


@jax.jit
def _cstp_forward_split(protein, text, p_wt, p_b2, t_wt, t_b2):
    (p,) = _normalize_project_pallas((protein,), (p_wt.astype(protein.dtype),), (p_b2,))
    (t,) = _normalize_project_pallas((text,), (t_wt.astype(text.dtype),), (t_b2,))
    return p, t


def _prep_linear(w, b):
    """PyTorch nn.Linear params (Dout, Din) + (Dout,) -> pre-transposed
    (Din, Dout) weight and (1, Dout) bias.  Done once at init."""
    return jnp.asarray(w.T), jnp.asarray(b).reshape(1, -1)


class CSTPBaseJAX:
    """JAX/Pallas port of CSTPBase (forward pass only)."""

    def __init__(self, protein_projection_input_dim, protein_projection_output_dim,
                 text_projection_input_dim, text_projection_output_dim,
                 n_heads=None, n_layers=None, alpha=0.5, key=None):
        if key is None:
            key = jax.random.PRNGKey(0)
        k1, k2, k3, k4 = jax.random.split(key, 4)
        # Deterministic init mimicking nn.Linear's uniform(-1/sqrt(in), 1/sqrt(in))
        pb = 1.0 / jnp.sqrt(jnp.float32(protein_projection_input_dim))
        tb = 1.0 / jnp.sqrt(jnp.float32(text_projection_input_dim))
        # PyTorch-layout params kept for the reference check.
        self.protein_w = jax.random.uniform(
            k1, (protein_projection_output_dim, protein_projection_input_dim),
            jnp.float32, -pb, pb)
        self.protein_b = jax.random.uniform(
            k2, (protein_projection_output_dim,), jnp.float32, -pb, pb)
        self.text_w = jax.random.uniform(
            k3, (text_projection_output_dim, text_projection_input_dim),
            jnp.float32, -tb, tb)
        self.text_b = jax.random.uniform(
            k4, (text_projection_output_dim,), jnp.float32, -tb, tb)

        # Hoisted out of the per-call path: transpose once at init.
        self.protein_wt, self.protein_b2 = _prep_linear(self.protein_w, self.protein_b)
        self.text_wt, self.text_b2 = _prep_linear(self.text_w, self.text_b)

        # TODO(synk): train_epoch_counter / wall-clock bookkeeping and CUDA
        # autocast from the PyTorch module are training utilities with no
        # forward-pass equivalent here.

    def forward(self, protein_embeddings, text_embeddings):
        fwd = (_cstp_forward_fused
               if protein_embeddings.shape[0] == text_embeddings.shape[0]
               else _cstp_forward_split)
        return fwd(protein_embeddings, text_embeddings,
                   self.protein_wt, self.protein_b2,
                   self.text_wt, self.text_b2)


def _reference_forward(model, protein, text):
    """Pure-JAX reference for correctness check (F.normalize + Linear)."""
    def norm(x):
        n = jnp.sqrt(jnp.sum(x.astype(jnp.float32) ** 2, axis=-1, keepdims=True))
        return (x / jnp.maximum(n, _EPS)).astype(x.dtype)
    p = norm(protein) @ model.protein_w.T + model.protein_b
    t = norm(text) @ model.text_w.T + model.text_b
    return p, t


if __name__ == "__main__":
    key = jax.random.PRNGKey(0)
    k_model, k_prot, k_text = jax.random.split(key, 3)

    batch = 8
    protein_in, protein_out = 32, 64
    text_in, text_out = 48, 64

    model = CSTPBaseJAX(protein_in, protein_out, text_in, text_out,
                        n_heads=4, n_layers=2, key=k_model)

    protein_embeddings = jax.random.normal(k_prot, (batch, protein_in), jnp.float32)
    text_embeddings = jax.random.normal(k_text, (batch, text_in), jnp.float32)

    proj_protein, proj_text = model.forward(protein_embeddings, text_embeddings)
    jax.block_until_ready((proj_protein, proj_text))

    ref_p, ref_t = _reference_forward(model, protein_embeddings, text_embeddings)
    assert proj_protein.shape == (batch, protein_out)
    assert proj_text.shape == (batch, text_out)
    assert jnp.allclose(proj_protein, ref_p, atol=2e-5, rtol=2e-5)
    assert jnp.allclose(proj_text, ref_t, atol=2e-5, rtol=2e-5)

    print("KERNEL_OK")
</pallas_src>

<mosaic_0001>
module attributes {stable_mosaic.version = 11 : i64} {
  func.func @kernel(%arg0: i32, %arg1: memref<8x32xf32, #tpu.memory_space<vmem>>, %arg2: memref<8x48xf32, #tpu.memory_space<vmem>>, %arg3: memref<32x64xf32, #tpu.memory_space<vmem>>, %arg4: memref<48x64xf32, #tpu.memory_space<vmem>>, %arg5: memref<1x64xf32, #tpu.memory_space<vmem>>, %arg6: memref<1x64xf32, #tpu.memory_space<vmem>>, %arg7: memref<8x64xf32, #tpu.memory_space<vmem>>, %arg8: memref<8x64xf32, #tpu.memory_space<vmem>>) attributes {dimension_semantics = [#tpu.dimension_semantics<parallel>], iteration_bounds = array<i64: 1>, scalar_prefetch = 0 : i64, scratch_operands = 0 : i64, tpu.core_type = #tpu.core_type<tc>, window_params = [{transform_indices = @transform_0, window_bounds = array<i64: 8, 32>}, {transform_indices = @transform_1, window_bounds = array<i64: 8, 48>}, {pipeline_mode = #tpu.pipeline_mode<synchronous>, transform_indices = @transform_2, window_bounds = array<i64: 32, 64>}, {pipeline_mode = #tpu.pipeline_mode<synchronous>, transform_indices = @transform_3, window_bounds = array<i64: 48, 64>}, {pipeline_mode = #tpu.pipeline_mode<synchronous>, transform_indices = @transform_4, window_bounds = array<i64: 1, 64>}, {pipeline_mode = #tpu.pipeline_mode<synchronous>, transform_indices = @transform_5, window_bounds = array<i64: 1, 64>}, {transform_indices = @transform_6, window_bounds = array<i64: 8, 64>}, {transform_indices = @transform_7, window_bounds = array<i64: 8, 64>}]} {
    %c0 = arith.constant 0 : index
    %c0_0 = arith.constant 0 : index
    %0 = vector.load %arg1[%c0, %c0_0] : memref<8x32xf32, #tpu.memory_space<vmem>>, vector<8x32xf32>
    %1 = arith.mulf %0, %0 : vector<8x32xf32>
    %cst = arith.constant dense<0.000000e+00> : vector<8xf32>
    %2 = vector.multi_reduction <add>, %1, %cst [1] : vector<8x32xf32> to vector<8xf32>
    %3 = vector.shape_cast %2 : vector<8xf32> to vector<8x1xf32>
    %4 = math.sqrt %3 : vector<8x1xf32>
    %cst_1 = arith.constant 9.99999996E-13 : f32
    %5 = vector.broadcast %cst_1 : f32 to vector<8x1xf32>
    %6 = arith.maximumf %4, %5 : vector<8x1xf32>
    %cst_2 = arith.constant 1.000000e+00 : f32
    %7 = vector.broadcast %cst_2 : f32 to vector<8x1xf32>
    %8 = arith.divf %7, %6 : vector<8x1xf32>
    %c0_3 = arith.constant 0 : index
    %c0_4 = arith.constant 0 : index
    %9 = vector.load %arg3[%c0_3, %c0_4] : memref<32x64xf32, #tpu.memory_space<vmem>>, vector<32x64xf32>
    %cst_5 = arith.constant dense<0.000000e+00> : vector<8x64xf32>
    %10 = tpu.matmul %0, %9, %cst_5 {dimension_numbers = #tpu.dot_dimension_numbers<[1], [0], [0], [1], [0, 0, 1, 1], [], []>} : vector<8x32xf32>, vector<32x64xf32>, vector<8x64xf32> -> vector<8x64xf32>
    %11 = vector.broadcast %8 : vector<8x1xf32> to vector<8x64xf32>
    %12 = arith.mulf %10, %11 : vector<8x64xf32>
    %c0_6 = arith.constant 0 : index
    %c0_7 = arith.constant 0 : index
    %13 = vector.load %arg5[%c0_6, %c0_7] : memref<1x64xf32, #tpu.memory_space<vmem>>, vector<1x64xf32>
    %14 = vector.broadcast %13 : vector<1x64xf32> to vector<8x64xf32>
    %15 = arith.addf %12, %14 : vector<8x64xf32>
    %c0_8 = arith.constant 0 : index
    %c0_9 = arith.constant 0 : index
    %16 = vector.load %arg7[%c0_8, %c0_9] : memref<8x64xf32, #tpu.memory_space<vmem>>, vector<8x64xf32>
    tpu.vector_store %arg7[%c0_8, %c0_9], %15 {strides = array<i32>} : memref<8x64xf32, #tpu.memory_space<vmem>>, vector<8x64xf32>,
    %c0_10 = arith.constant 0 : index
    %c0_11 = arith.constant 0 : index
    %17 = vector.load %arg2[%c0_10, %c0_11] : memref<8x48xf32, #tpu.memory_space<vmem>>, vector<8x48xf32>
    %18 = arith.mulf %17, %17 : vector<8x48xf32>
    %cst_12 = arith.constant dense<0.000000e+00> : vector<8xf32>
    %19 = vector.multi_reduction <add>, %18, %cst_12 [1] : vector<8x48xf32> to vector<8xf32>
    %20 = vector.shape_cast %19 : vector<8xf32> to vector<8x1xf32>
    %21 = math.sqrt %20 : vector<8x1xf32>
    %cst_13 = arith.constant 9.99999996E-13 : f32
    %22 = vector.broadcast %cst_13 : f32 to vector<8x1xf32>
    %23 = arith.maximumf %21, %22 : vector<8x1xf32>
    %cst_14 = arith.constant 1.000000e+00 : f32
    %24 = vector.broadcast %cst_14 : f32 to vector<8x1xf32>
    %25 = arith.divf %24, %23 : vector<8x1xf32>
    %c0_15 = arith.constant 0 : index
    %c0_16 = arith.constant 0 : index
    %26 = vector.load %arg4[%c0_15, %c0_16] : memref<48x64xf32, #tpu.memory_space<vmem>>, vector<48x64xf32>
    %cst_17 = arith.constant dense<0.000000e+00> : vector<8x64xf32>
    %27 = tpu.matmul %17, %26, %cst_17 {dimension_numbers = #tpu.dot_dimension_numbers<[1], [0], [0], [1], [0, 0, 1, 1], [], []>} : vector<8x48xf32>, vector<48x64xf32>, vector<8x64xf32> -> vector<8x64xf32>
    %28 = vector.broadcast %25 : vector<8x1xf32> to vector<8x64xf32>
    %29 = arith.mulf %27, %28 : vector<8x64xf32>
    %c0_18 = arith.constant 0 : index
    %c0_19 = arith.constant 0 : index
    %30 = vector.load %arg6[%c0_18, %c0_19] : memref<1x64xf32, #tpu.memory_space<vmem>>, vector<1x64xf32>
    %31 = vector.broadcast %30 : vector<1x64xf32> to vector<8x64xf32>
    %32 = arith.addf %29, %31 : vector<8x64xf32>
    %c0_20 = arith.constant 0 : index
    %c0_21 = arith.constant 0 : index
    %33 = vector.load %arg8[%c0_20, %c0_21] : memref<8x64xf32, #tpu.memory_space<vmem>>, vector<8x64xf32>
    tpu.vector_store %arg8[%c0_20, %c0_21], %32 {strides = array<i32>} : memref<8x64xf32, #tpu.memory_space<vmem>>, vector<8x64xf32>,
    return
  }
  func.func @transform_0(%arg0: i32) -> (i32, i32) {
    %c0_i32 = arith.constant 0 : i32
    %c0_i32_0 = arith.constant 0 : i32
    return %arg0, %c0_i32 : i32, i32
  }
  func.func @transform_1(%arg0: i32) -> (i32, i32) {
    %c0_i32 = arith.constant 0 : i32
    %c0_i32_0 = arith.constant 0 : i32
    return %arg0, %c0_i32 : i32, i32
  }
  func.func @transform_2(%arg0: i32) -> (i32, i32) {
    %c0_i32 = arith.constant 0 : i32
    %c0_i32_0 = arith.constant 0 : i32
    %c0_i32_1 = arith.constant 0 : i32
    return %c0_i32, %c0_i32_0 : i32, i32
  }
  func.func @transform_3(%arg0: i32) -> (i32, i32) {
    %c0_i32 = arith.constant 0 : i32
    %c0_i32_0 = arith.constant 0 : i32
    %c0_i32_1 = arith.constant 0 : i32
    return %c0_i32, %c0_i32_0 : i32, i32
  }
  func.func @transform_4(%arg0: i32) -> (i32, i32) {
    %c0_i32 = arith.constant 0 : i32
    %c0_i32_0 = arith.constant 0 : i32
    %c0_i32_1 = arith.constant 0 : i32
    return %c0_i32, %c0_i32_0 : i32, i32
  }
  func.func @transform_5(%arg0: i32) -> (i32, i32) {
    %c0_i32 = arith.constant 0 : i32
    %c0_i32_0 = arith.constant 0 : i32
    %c0_i32_1 = arith.constant 0 : i32
    return %c0_i32, %c0_i32_0 : i32, i32
  }
  func.func @transform_6(%arg0: i32) -> (i32, i32) {
    %c0_i32 = arith.constant 0 : i32
    %c0_i32_0 = arith.constant 0 : i32
    return %arg0, %c0_i32 : i32, i32
  }
  func.func @transform_7(%arg0: i32) -> (i32, i32) {
    %c0_i32 = arith.constant 0 : i32
    %c0_i32_0 = arith.constant 0 : i32
    return %arg0, %c0_i32 : i32, i32
  }
}

</mosaic_0001>

<llo_original>
// kernel: _cstp_forward_fused.1
$region0: #{_cstp_forward_fused.1}
  #allocation0 [shape = 'u32[]', space=smem, size = 0x4, offset = 0x4, fixed_abs, tag = 'smem constant byte address 0x4 - core index']
  #allocation1 [shape = 'u32[144,128]{1,0:T(1,128)}', space=vmem, size = 0x12000, scoped, tag = 'internal scratch']
  %s0 = inlined_call_operand.hbm [shape: f32[8,32], index: 0, kind: input, shape index: {}]
  %s1 = inlined_call_operand.hbm [shape: f32[8,48], index: 1, kind: input, shape index: {}]
  %s2 = inlined_call_operand.hbm [shape: f32[32,64], index: 2, kind: input, shape index: {}]
  %s3 = inlined_call_operand.hbm [shape: f32[48,64], index: 3, kind: input, shape index: {}]
  %s4 = inlined_call_operand.vmem [shape: f32[1,64], index: 4, kind: input, shape index: {}]
  %s5 = inlined_call_operand.vmem [shape: f32[1,64], index: 5, kind: input, shape index: {}]
  %s6 = inlined_call_operand.hbm [shape: f32[8,64], index: 6, kind: output, shape index: {0}]
  %s7 = inlined_call_operand.hbm [shape: f32[8,64], index: 7, kind: output, shape index: {1}]
  %8 = xla_tuple %s6, %s7
  %s9 = sld [smem:[#allocation0]]
  $region58: #{_cstp_forward_fused.1} parent=0
    _
  %s11 = ssub.s32 1, %s9
  %s12 = scalar_select 0, %s11, %s9
  $region1: #{_cstp_forward_fused.1} parent=0
    #allocation2 [shape = 'u8[4096]{0}', space=vmem, size = 0x1000, scoped, tag = 'input window, operand 0, single buffered']
    #allocation3 [shape = 's32[1]{0}', space=sflag, size = 0x4, scoped, tag = 'scoped memory for _cstp_forward_fused.1']
    #allocation4 [shape = 's32[1]{0}', space=sflag, size = 0x4, scoped, tag = 'scoped memory for _cstp_forward_fused.1']
    #allocation5 [shape = 'u8[4096]{0}', space=vmem, size = 0x1000, scoped, tag = 'input window, operand 1, single buffered']
    #allocation6 [shape = 's32[1]{0}', space=sflag, size = 0x4, scoped, tag = 'scoped memory for _cstp_forward_fused.1']
    #allocation7 [shape = 'u8[16384]{0}', space=vmem, size = 0x4000, scoped, tag = 'input window, operand 2, single buffered']
    #allocation8 [shape = 'u8[24576]{0}', space=vmem, size = 0x6000, scoped, tag = 'input window, operand 3, single buffered']
    #allocation9 [shape = 's32[1]{0}', space=sflag, size = 0x4, scoped, tag = 'scoped memory for _cstp_forward_fused.1']
    #allocation10 [shape = 'u8[4096]{0}', space=vmem, size = 0x1000, scoped, tag = 'output window, operand 0, single buffered']
    #allocation11 [shape = 'u8[4096]{0}', space=vmem, size = 0x1000, scoped, tag = 'output window, operand 1, single buffered']
    #allocation12 [shape = 's32[1]{0}', space=sflag, size = 0x4, scoped, tag = 'scoped memory for _cstp_forward_fused.1']
    %13 = vsyncpa [#allocation3], 0
    %14 = vsyncpa [#allocation6], 0
    %15 = vsyncpa [#allocation9], 0
    %16 = vsyncpa [#allocation4], 0
    %17 = vsyncpa [#allocation12], 0
    // Predicated region
    $region2: #{_cstp_forward_fused.1} parent=1 // pred_check
      _
    $region3: #{_cstp_forward_fused.1} parent=1 // pred_check_branch
      %19 = sbr.rel (0) target = $region5
    $region4: #{_cstp_forward_fused.1} parent=1 // pred_region
      %s21 = ssub.s32 128, 128
      %22 = vsyncadd [#allocation3], %s21
      %s24 = sshll.u32 [#allocation2], 4
      %s25 = int_to_ptr.vmem [resolvable:$true] %s24
      %27 = dma.hbm_to_vmem [thread:$0]  %s0, 128, %s25, [#allocation3]
    $region5: #{_cstp_forward_fused.1} parent=1 // pred_fallthru
      _
    // Predicated region
    $region6: #{_cstp_forward_fused.1} parent=1 // pred_check
      _
    $region7: #{_cstp_forward_fused.1} parent=1 // pred_check_branch
      %29 = sbr.rel (0) target = $region9
    $region8: #{_cstp_forward_fused.1} parent=1 // pred_region
      %s31 = ssub.s32 128, 128
      %32 = vsyncadd [#allocation6], %s31
      %s34 = sshll.u32 [#allocation5], 4
      %s35 = int_to_ptr.vmem [resolvable:$true] %s34
      %37 = dma.hbm_to_vmem [thread:$0]  %s1, 128, %s35, [#allocation6]
    $region9: #{_cstp_forward_fused.1} parent=1 // pred_fallthru
      _
    // Predicated region
    $region10: #{_cstp_forward_fused.1} parent=1 // pred_check
      _
    $region11: #{_cstp_forward_fused.1} parent=1 // pred_check_branch
      %39 = sbr.rel (0) target = $region13
    $region12: #{_cstp_forward_fused.1} parent=1 // pred_region
      %s41 = ssub.s32 512, 512
      %42 = vsyncadd [#allocation6], %s41
      %s43 = sshll.u32 [#allocation7], 4
      %s44 = int_to_ptr.vmem [resolvable:$true] %s43
      %49 = dma.hbm_to_vmem [thread:$0]  %s2, 512, %s44, [#allocation6], 128, 128, 8
    $region13: #{_cstp_forward_fused.1} parent=1 // pred_fallthru
      _
    // Predicated region
    $region14: #{_cstp_forward_fused.1} parent=1 // pred_check
      _
    $region15: #{_cstp_forward_fused.1} parent=1 // pred_check_branch
      %51 = sbr.rel (0) target = $region17
    $region16: #{_cstp_forward_fused.1} parent=1 // pred_region
      %s53 = ssub.s32 768, 768
      %54 = vsyncadd [#allocation9], %s53
      %s55 = sshll.u32 [#allocation8], 4
      %s56 = int_to_ptr.vmem [resolvable:$true] %s55
      %61 = dma.hbm_to_vmem [thread:$0]  %s3, 768, %s56, [#allocation9], 128, 128, 8
    $region17: #{_cstp_forward_fused.1} parent=1 // pred_fallthru
      _
    // Predicated region
    $region18: #{_cstp_forward_fused.1} parent=1 // pred_check
      _
    $region19: #{_cstp_forward_fused.1} parent=1 // pred_check_branch
      %63 = sbr.rel (0) target = $region21
    $region20: #{_cstp_forward_fused.1} parent=1 // pred_region
      _
    $region21: #{_cstp_forward_fused.1} parent=1 // pred_fallthru
      _
    // Predicated region
    $region22: #{_cstp_forward_fused.1} parent=1 // pred_check
      _
    $region23: #{_cstp_forward_fused.1} parent=1 // pred_check_branch
      %65 = sbr.rel (0) target = $region25
    $region24: #{_cstp_forward_fused.1} parent=1 // pred_region
      _
    $region25: #{_cstp_forward_fused.1} parent=1 // pred_fallthru
      _
    // Predicated region
    $region26: #{_cstp_forward_fused.1} parent=1 // pred_check
      _
    $region27: #{_cstp_forward_fused.1} parent=1 // pred_check_branch
      %67 = sbr.rel (0) target = $region29
    $region28: #{_cstp_forward_fused.1} parent=1 // pred_region
      %68 = dma.done [#allocation3], 128
    $region29: #{_cstp_forward_fused.1} parent=1 // pred_fallthru
      _
    // Predicated region
    $region30: #{_cstp_forward_fused.1} parent=1 // pred_check
      _
    $region31: #{_cstp_forward_fused.1} parent=1 // pred_check_branch
      %70 = sbr.rel (0) target = $region33
    $region32: #{_cstp_forward_fused.1} parent=1 // pred_region
      %71 = dma.done [#allocation6], 128
    $region33: #{_cstp_forward_fused.1} parent=1 // pred_fallthru
      _
    // Predicated region
    $region34: #{_cstp_forward_fused.1} parent=1 // pred_check
      _
    $region35: #{_cstp_forward_fused.1} parent=1 // pred_check_branch
      %73 = sbr.rel (0) target = $region37
    $region36: #{_cstp_forward_fused.1} parent=1 // pred_region
      %74 = dma.done [#allocation6], 512
    $region37: #{_cstp_forward_fused.1} parent=1 // pred_fallthru
      _
    // Predicated region
    $region38: #{_cstp_forward_fused.1} parent=1 // pred_check
      _
    $region39: #{_cstp_forward_fused.1} parent=1 // pred_check_branch
      %76 = sbr.rel (0) target = $region41
    $region40: #{_cstp_forward_fused.1} parent=1 // pred_region
      %77 = dma.done [#allocation9], 768
    $region41: #{_cstp_forward_fused.1} parent=1 // pred_fallthru
      _
    %v78 = vld [vmem:[#allocation2] sm:$0xff]
    %v79 = vmul.f32 %v78, %v78
    %vm80 = vcmask 261120
    %v81 = vsel %vm80, %v79, 0.0
    %82 = vadd.xlane.f32.xlu0 %v81
    %v83 = vpop.xlane.xlu0 %82
    %v84 = vrsqrt.pop %v83
    %v85 = vmul.f32 %v83, %v84
    %vm86 = vcmp.eq.f32.partialorder %v83, inf
    %v87 = vsel %vm86, %v83, %v85
    %vm88 = vcmp.eq.f32.partialorder %v83, 0.0
    %v89 = vand.u32 %v83, 2147483648
    %v90 = vsel %vm88, %v89, %v87
    %v91 = vmax.f32 %v90, 1e-12
    %v92 = vrcp.pop %v91
    %v93 = vmul.f32 1.0, %v92
    %v94 = vld [vmem:[#allocation7] sm:$0xff]
    %v95 = vld [vmem:[#allocation7 + $0x8] sm:$0xff]
    %v96 = vld [vmem:[#allocation7 + $0x10] sm:$0xff]
    %v97 = vld [vmem:[#allocation7 + $0x18] sm:$0xff]
    %v99 = vsel %vm80, %v78, 0
    %101 = vmatprep.subr.mxu0 0.0
    %102 = vmatpush1.msra.mxu0 %v94
    %103 = vmatprep.subr.mxu0 0.0
    %104 = vmatpush1.msra.mxu0 %v95
    %105 = vmatprep.subr.mxu0 0.0
    %106 = vmatpush1.msra.mxu0 %v96
    %107 = vmatprep.subr.mxu0 0.0
    %108 = vmatpush1.msra.mxu0 %v97
    %109 = vmatprep.subr.mxu0 0.0
    %110 = vmatpush1.msra.mxu0 0.0
    %111 = vmatprep.subr.mxu0 0.0
    %112 = vmatpush1.msra.mxu0 0.0
    %113 = vmatprep.subr.mxu0 0.0
    %114 = vmatpush1.msra.mxu0 0.0
    %115 = vmatprep.subr.mxu0 0.0
    %116 = vmatpush1.msra.mxu0 0.0
    %117 = vmatprep.subr.mxu0 0.0
    %118 = vmatpush1.msra.mxu0 0.0
    %119 = vmatprep.subr.mxu0 0.0
    %120 = vmatpush1.msra.mxu0 0.0
    %121 = vmatprep.subr.mxu0 0.0
    %122 = vmatpush1.msra.mxu0 0.0
    %123 = vmatprep.subr.mxu0 0.0
    %124 = vmatpush1.msra.mxu0 0.0
    %125 = vmatprep.subr.mxu0 0.0
    %126 = vmatpush1.msra.mxu0 0.0
    %127 = vmatprep.subr.mxu0 0.0
    %128 = vmatpush1.msra.mxu0 0.0
    %129 = vmatprep.subr.mxu0 0.0
    %130 = vmatpush1.msra.mxu0 0.0
    %131 = vmatprep.subr.mxu0 0.0
    %132 = vmatpush1.msra.mxu0 0.0
    %133 = vmatprep.subr.mxu0 0.0
    %134 = vmatpush1.msra.mxu0 0.0
    %135 = vmatprep.subr.mxu0 0.0
    %136 = vmatpush1.msra.mxu0 0.0
    %137 = vmatprep.subr.mxu0 0.0
    %138 = vmatpush1.msra.mxu0 0.0
    %139 = vmatprep.subr.mxu0 0.0
    %140 = vmatpush1.msra.mxu0 0.0
    %141 = vmatprep.subr.mxu0 0.0
    %142 = vmatpush1.msra.mxu0 0.0
    %143 = vmatprep.subr.mxu0 0.0
    %144 = vmatpush1.msra.mxu0 0.0
    %145 = vmatprep.subr.mxu0 0.0
    %146 = vmatpush1.msra.mxu0 0.0
    %147 = vmatprep.subr.mxu0 0.0
    %148 = vmatpush1.msra.mxu0 0.0
    %149 = vmatprep.subr.mxu0 0.0
    %150 = vmatpush1.msra.mxu0 0.0
    %151 = vmatprep.subr.mxu0 0.0
    %152 = vmatpush1.msra.mxu0 0.0
    %153 = vmatprep.subr.mxu0 0.0
    %154 = vmatpush1.msra.mxu0 0.0
    %155 = vmatprep.subr.mxu0 0.0
    %156 = vmatpush1.msra.mxu0 0.0
    %157 = vmatprep.subr.mxu0 0.0
    %158 = vmatpush1.msra.mxu0 0.0
    %159 = vmatprep.subr.mxu0 0.0
    %160 = vmatpush1.msra.mxu0 0.0
    %161 = vmatprep.subr.mxu0 0.0
    %162 = vmatpush1.msra.mxu0 0.0
    %163 = vmatprep.subr.mxu0 0.0
    %164 = vmatpush1.msra.mxu0 0.0
    %165 = vmatprep.mubr.f32.mxu0 0.0
    %166 = vmatmul.mubr.f32.gmra.mrb[0].mxu0 %v99
    %v167 = vpop.f32.mrb[0].mxu0
    %v168 = vadd.f32 0.0, %v167
    %v169 = vpop.f32.mrb[0].mxu0
    %170 = vdwg.mxu0
    %v171 = vmul.f32 %v168, %v93
    %v172 = vld [vmem:[%s4] sm:$0x1]
    %v174 = vlaneseq
    %v175 = vshrl.u32 %v174, 7
    %v176 = vsub.s32 0, %v175
    %v177 = vrot.slane %v172, %v176
    %v179 = vadd.f32 %v171, %v177
    %vm180 = vcmask 523264
    %181 = vst.msk [vmem:[#allocation10] sm:$0xff] %vm180, %v179
    %v182 = vld [vmem:[#allocation5] sm:$0xff]
    %v183 = vmul.f32 %v182, %v182
    %vm184 = vcmask 392192
    %v185 = vsel %vm184, %v183, 0.0
    %186 = vadd.xlane.f32.xlu0 %v185
    %v187 = vpop.xlane.xlu0 %186
    %v188 = vrsqrt.pop %v187
    %v189 = vmul.f32 %v187, %v188
    %vm190 = vcmp.eq.f32.partialorder %v187, inf
    %v191 = vsel %vm190, %v187, %v189
    %vm192 = vcmp.eq.f32.partialorder %v187, 0.0
    %v193 = vand.u32 %v187, 2147483648
    %v194 = vsel %vm192, %v193, %v191
    %v195 = vmax.f32 %v194, 1e-12
    %v196 = vrcp.pop %v195
    %v197 = vmul.f32 1.0, %v196
    %v198 = vld [vmem:[#allocation8] sm:$0xff]
    %v199 = vld [vmem:[#allocation8 + $0x8] sm:$0xff]
    %v200 = vld [vmem:[#allocation8 + $0x10] sm:$0xff]
    %v201 = vld [vmem:[#allocation8 + $0x18] sm:$0xff]
    %v202 = vld [vmem:[#allocation8 + $0x20] sm:$0xff]
    %v203 = vld [vmem:[#allocation8 + $0x28] sm:$0xff]
    %v205 = vsel %vm184, %v182, 0
    %207 = vmatprep.subr.mxu0 0.0
    %208 = vmatpush1.msra.mxu0 %v198
    %209 = vmatprep.subr.mxu0 0.0
    %210 = vmatpush1.msra.mxu0 %v199
    %211 = vmatprep.subr.mxu0 0.0
    %212 = vmatpush1.msra.mxu0 %v200
    %213 = vmatprep.subr.mxu0 0.0
    %214 = vmatpush1.msra.mxu0 %v201
    %215 = vmatprep.subr.mxu0 0.0
    %216 = vmatpush1.msra.mxu0 %v202
    %217 = vmatprep.subr.mxu0 0.0
    %218 = vmatpush1.msra.mxu0 %v203
    %219 = vmatprep.subr.mxu0 0.0
    %220 = vmatpush1.msra.mxu0 0.0
    %221 = vmatprep.subr.mxu0 0.0
    %222 = vmatpush1.msra.mxu0 0.0
    %223 = vmatprep.subr.mxu0 0.0
    %224 = vmatpush1.msra.mxu0 0.0
    %225 = vmatprep.subr.mxu0 0.0
    %226 = vmatpush1.msra.mxu0 0.0
    %227 = vmatprep.subr.mxu0 0.0
    %228 = vmatpush1.msra.mxu0 0.0
    %229 = vmatprep.subr.mxu0 0.0
    %230 = vmatpush1.msra.mxu0 0.0
    %231 = vmatprep.subr.mxu0 0.0
    %232 = vmatpush1.msra.mxu0 0.0
    %233 = vmatprep.subr.mxu0 0.0
    %234 = vmatpush1.msra.mxu0 0.0
    %235 = vmatprep.subr.mxu0 0.0
    %236 = vmatpush1.msra.mxu0 0.0
    %237 = vmatprep.subr.mxu0 0.0
    %238 = vmatpush1.msra.mxu0 0.0
    %239 = vmatprep.subr.mxu0 0.0
    %240 = vmatpush1.msra.mxu0 0.0
    %241 = vmatprep.subr.mxu0 0.0
    %242 = vmatpush1.msra.mxu0 0.0
    %243 = vmatprep.subr.mxu0 0.0
    %244 = vmatpush1.msra.mxu0 0.0
    %245 = vmatprep.subr.mxu0 0.0
    %246 = vmatpush1.msra.mxu0 0.0
    %247 = vmatprep.subr.mxu0 0.0
    %248 = vmatpush1.msra.mxu0 0.0
    %249 = vmatprep.subr.mxu0 0.0
    %250 = vmatpush1.msra.mxu0 0.0
    %251 = vmatprep.subr.mxu0 0.0
    %252 = vmatpush1.msra.mxu0 0.0
    %253 = vmatprep.subr.mxu0 0.0
    %254 = vmatpush1.msra.mxu0 0.0
    %255 = vmatprep.subr.mxu0 0.0
    %256 = vmatpush1.msra.mxu0 0.0
    %257 = vmatprep.subr.mxu0 0.0
    %258 = vmatpush1.msra.mxu0 0.0
    %259 = vmatprep.subr.mxu0 0.0
    %260 = vmatpush1.msra.mxu0 0.0
    %261 = vmatprep.subr.mxu0 0.0
    %262 = vmatpush1.msra.mxu0 0.0
    %263 = vmatprep.subr.mxu0 0.0
    %264 = vmatpush1.msra.mxu0 0.0
    %265 = vmatprep.subr.mxu0 0.0
    %266 = vmatpush1.msra.mxu0 0.0
    %267 = vmatprep.subr.mxu0 0.0
    %268 = vmatpush1.msra.mxu0 0.0
    %269 = vmatprep.subr.mxu0 0.0
    %270 = vmatpush1.msra.mxu0 0.0
    %271 = vmatprep.mubr.f32.mxu0 0.0
    %272 = vmatmul.mubr.f32.gmra.mrb[0].mxu0 %v205
    %v273 = vpop.f32.mrb[0].mxu0
    %v274 = vadd.f32 0.0, %v273
    %v275 = vpop.f32.mrb[0].mxu0
    %276 = vdwg.mxu0
    %v277 = vmul.f32 %v274, %v197
    %v278 = vld [vmem:[%s5] sm:$0x1]
    %v280 = vlaneseq
    %v281 = vshrl.u32 %v280, 7
    %v282 = vsub.s32 0, %v281
    %v283 = vrot.slane %v278, %v282
    %v285 = vadd.f32 %v277, %v283
    %286 = vst.msk [vmem:[#allocation11] sm:$0xff] %vm180, %v285
    // Predicated region
    $region42: #{_cstp_forward_fused.1} parent=1 // pred_check
      _
    $region43: #{_cstp_forward_fused.1} parent=1 // pred_check_branch
      %288 = sbr.rel (0) target = $region45
    $region44: #{_cstp_forward_fused.1} parent=1 // pred_region
      %s290 = ssub.s32 128, 128
      %291 = vsyncadd [#allocation4], %s290
      %s293 = sshll.u32 [#allocation10], 4
      %s294 = int_to_ptr.vmem [resolvable:$true] %s293
      %296 = dma.vmem_to_hbm [thread:$0]  %s294, 128, %s6, [#allocation4]
    $region45: #{_cstp_forward_fused.1} parent=1 // pred_fallthru
      _
    // Predicated region
    $region46: #{_cstp_forward_fused.1} parent=1 // pred_check
      _
    $region47: #{_cstp_forward_fused.1} parent=1 // pred_check_branch
      %298 = sbr.rel (0) target = $region49
    $region48: #{_cstp_forward_fused.1} parent=1 // pred_region
      %s300 = ssub.s32 128, 128
      %301 = vsyncadd [#allocation12], %s300
      %s303 = sshll.u32 [#allocation11], 4
      %s304 = int_to_ptr.vmem [resolvable:$true] %s303
      %306 = dma.vmem_to_hbm [thread:$0]  %s304, 128, %s7, [#allocation12]
    $region49: #{_cstp_forward_fused.1} parent=1 // pred_fallthru
      _
    // Predicated region
    $region50: #{_cstp_forward_fused.1} parent=1 // pred_check
      _
    $region51: #{_cstp_forward_fused.1} parent=1 // pred_check_branch
      %308 = sbr.rel (0) target = $region53
    $region52: #{_cstp_forward_fused.1} parent=1 // pred_region
      %309 = dma.done [#allocation4], 128
    $region53: #{_cstp_forward_fused.1} parent=1 // pred_fallthru
      _
    // Predicated region
    $region54: #{_cstp_forward_fused.1} parent=1 // pred_check
      _
    $region55: #{_cstp_forward_fused.1} parent=1 // pred_check_branch
      %311 = sbr.rel (0) target = $region57
    $region56: #{_cstp_forward_fused.1} parent=1 // pred_region
      %312 = dma.done [#allocation12], 128
    $region57: #{_cstp_forward_fused.1} parent=1 // pred_fallthru
      _
    %313 = vsyncpa [#allocation3], 1
    %314 = vsyncpa [#allocation6], 1
    %315 = vsyncpa [#allocation9], 1
    %316 = vsyncpa [#allocation4], 1
    %317 = vsyncpa [#allocation12], 1

</llo_original>
